<compile_context>
chip_gen: v6e
topology: v6e:2x2x1
jax: 0.10.0
libtpu: 0.0.40
codegen_flags: <defaults>
</compile_context>

<pallas_src>
import math

import jax
import jax.numpy as jnp
from jax import lax
from jax.experimental import pallas as pl
from jax.experimental.pallas import tpu as pltpu

BN_EPS = 1e-5
LANE = 128
VMEM_LIMIT = 32 * 1024 * 1024  # <= v7x's 64 MiB physical; safe on v5e/v6e too


def _round_up(x, m):
    return (x + m - 1) // m * m


def _conv_stats_kernel(p_ref, w_ref, sum_ref, ssq_ref):
    # p_ref   : [TM, K]            bf16  im2col patch rows
    # w_ref   : [K, Cout_pad]      bf16  conv weight, lane padded
    # sum_ref : [1, 1, Cout_pad]   f32   per-tile partial sum over pixels
    # ssq_ref : [1, 1, Cout_pad]   f32   per-tile partial sum of squares
    acc = jnp.dot(p_ref[...], w_ref[...], preferred_element_type=jnp.float32)
    # Zero-padded rows give acc == 0 (no conv bias in-kernel) -> contribute 0.
    sum_ref[0] = jnp.sum(acc, axis=0, keepdims=True)
    ssq_ref[0] = jnp.sum(acc * acc, axis=0, keepdims=True)


def _conv_bn_relu_kernel(p_ref, w_ref, scale_ref, shift_ref, o_ref):
    # Recompute the cheap K<=36 conv and fuse BN scale/shift + ReLU so only the
    # final activation is ever written to HBM.
    acc = jnp.dot(p_ref[...], w_ref[...], preferred_element_type=jnp.float32)
    o_ref[...] = jnp.maximum(acc * scale_ref[...] + shift_ref[...], 0.0)


def relation_conv_block(x_nchw, w_oihw, bias, gamma, beta, padding=0,
                        row_tile=256):
    """x_nchw: [N, Cin, H, W] f32. Returns [N, Cout, Ho, Wo] f32 (train-mode BN)."""
    del bias  # per-channel conv bias is exactly cancelled by train-mode BN mean
    N, Cin, H, W = x_nchw.shape
    Cout = w_oihw.shape[0]
    kh = kw = 3
    Cout_pad = _round_up(Cout, LANE)
    K = kh * kw * Cin

    # ---- layout glue (plain JAX): NCHW -> NHWC, spatial pad, im2col rows ----
    x = jnp.transpose(x_nchw, (0, 2, 3, 1)).astype(jnp.float32)   # [N, H, W, Cin]
    if padding > 0:
        x = jnp.pad(x, ((0, 0), (padding, padding), (padding, padding), (0, 0)))
    Hp, Wp = x.shape[1], x.shape[2]
    Ho, Wo = Hp - kh + 1, Wp - kw + 1

    # patch row k-index = (dh*3 + dw)*Cin + cin  (matches weight reshape below)
    taps = [x[:, dh:dh + Ho, dw:dw + Wo, :]
            for dh in range(kh) for dw in range(kw)]
    patches = jnp.concatenate(taps, axis=-1).reshape(N * Ho * Wo, K)

    M = N * Ho * Wo                       # total output pixels across the batch
    TM = min(row_tile, _round_up(M, 8))   # row tile (sublane aligned)
    M_pad = _round_up(M, TM)
    n_blocks = M_pad // TM
    patches = jnp.pad(patches, ((0, M_pad - M), (0, 0))).astype(jnp.bfloat16)

    # weight [Cout, Cin, 3, 3] -> [K, Cout_pad]
    w2d = jnp.transpose(w_oihw, (2, 3, 1, 0)).reshape(K, Cout)
    w2d = jnp.pad(w2d, ((0, 0), (0, Cout_pad - Cout))).astype(jnp.bfloat16)

    gamma_p = jnp.pad(gamma.astype(jnp.float32),
                      (0, Cout_pad - Cout)).reshape(1, Cout_pad)
    beta_p = jnp.pad(beta.astype(jnp.float32),
                     (0, Cout_pad - Cout)).reshape(1, Cout_pad)

    # -------- pass 1: single-matmul conv + per-tile partial BN stats --------
    flops1 = 2 * M_pad * K * Cout_pad + 4 * M_pad * Cout_pad
    bytes1 = (patches.size * 2 + w2d.size * 2 + 2 * n_blocks * Cout_pad * 4)
    sums, ssqs = pl.pallas_call(
        _conv_stats_kernel,
        out_shape=(
            jax.ShapeDtypeStruct((n_blocks, 1, Cout_pad), jnp.float32),
            jax.ShapeDtypeStruct((n_blocks, 1, Cout_pad), jnp.float32),
        ),
        grid=(n_blocks,),
        in_specs=[
            pl.BlockSpec((TM, K), lambda i: (i, 0)),
            pl.BlockSpec((K, Cout_pad), lambda i: (0, 0)),
        ],
        out_specs=(
            pl.BlockSpec((1, 1, Cout_pad), lambda i: (i, 0, 0)),
            pl.BlockSpec((1, 1, Cout_pad), lambda i: (i, 0, 0)),
        ),
        compiler_params=pltpu.CompilerParams(
            dimension_semantics=("parallel",),
            vmem_limit_bytes=VMEM_LIMIT),
        cost_estimate=pl.CostEstimate(flops=flops1, transcendentals=0,
                                      bytes_accessed=bytes1),
    )(patches, w2d)

    # --------------- finalize BN batch stats (tiny, plain JAX) ---------------
    # TODO(synk): E[x^2]-E[x]^2 in f32 is cancellation-prone at production
    # scales; fine for these shapes / random init.
    count = jnp.float32(M)
    mean = jnp.sum(sums, axis=0) / count                      # [1, Cout_pad]
    var = jnp.sum(ssqs, axis=0) / count - mean * mean         # biased variance
    inv_std = lax.rsqrt(var + BN_EPS)
    scale = gamma_p * inv_std
    shift = beta_p - mean * scale

    # ------- pass 2: recompute conv, fuse scale/shift + ReLU, write out -------
    flops2 = 2 * M_pad * K * Cout_pad + 3 * M_pad * Cout_pad
    bytes2 = (patches.size * 2 + w2d.size * 2 + 2 * Cout_pad * 4
              + M_pad * Cout_pad * 4)
    out_pad = pl.pallas_call(
        _conv_bn_relu_kernel,
        out_shape=jax.ShapeDtypeStruct((M_pad, Cout_pad), jnp.float32),
        grid=(n_blocks,),
        in_specs=[
            pl.BlockSpec((TM, K), lambda i: (i, 0)),
            pl.BlockSpec((K, Cout_pad), lambda i: (0, 0)),
            pl.BlockSpec((1, Cout_pad), lambda i: (0, 0)),
            pl.BlockSpec((1, Cout_pad), lambda i: (0, 0)),
        ],
        out_specs=pl.BlockSpec((TM, Cout_pad), lambda i: (i, 0)),
        compiler_params=pltpu.CompilerParams(
            dimension_semantics=("parallel",),
            vmem_limit_bytes=VMEM_LIMIT),
        cost_estimate=pl.CostEstimate(flops=flops2, transcendentals=0,
                                      bytes_accessed=bytes2),
    )(patches, w2d, scale, shift)

    # ---- drop row/channel padding, un-flatten, back to NCHW ----
    out = out_pad[:M, :Cout].reshape(N, Ho, Wo, Cout)
    return jnp.transpose(out, (0, 3, 1, 2))


def _reference(x_nchw, w_oihw, bias, gamma, beta, padding=0):
    """Pure-JAX reference mirroring PyTorch Conv2d + BatchNorm2d(train) + ReLU."""
    conv = lax.conv_general_dilated(
        x_nchw.astype(jnp.float32), w_oihw.astype(jnp.float32),
        window_strides=(1, 1), padding=[(padding, padding), (padding, padding)],
        dimension_numbers=("NCHW", "OIHW", "NCHW"))
    conv = conv + bias.reshape(1, -1, 1, 1)
    mean = jnp.mean(conv, axis=(0, 2, 3), keepdims=True)
    var = jnp.mean((conv - mean) ** 2, axis=(0, 2, 3), keepdims=True)
    y = (conv - mean) * lax.rsqrt(var + BN_EPS)
    y = y * gamma.reshape(1, -1, 1, 1) + beta.reshape(1, -1, 1, 1)
    return jnp.maximum(y, 0.0)


if __name__ == "__main__":
    key = jax.random.PRNGKey(0)
    k_x, k_w, k_b = jax.random.split(key, 3)

    # small shapes consistent with the module
    N, Cin, H, W = 2, 4, 16, 16
    Cout = 8
    padding = 0

    x = jax.random.normal(k_x, (N, Cin, H, W), dtype=jnp.float32)

    # backbone.init_layer: Conv weight ~ N(0, sqrt(2/(kh*kw*outdim)))
    std = math.sqrt(2.0 / float(3 * 3 * Cout))
    w = std * jax.random.normal(k_w, (Cout, Cin, 3, 3), dtype=jnp.float32)
    # Conv bias keeps PyTorch's default init (uniform); deterministic here.
    fan_in = Cin * 3 * 3
    bias = (1.0 / math.sqrt(fan_in)) * (
        2.0 * jax.random.uniform(k_b, (Cout,), dtype=jnp.float32) - 1.0)
    # BatchNorm: weight=1, bias=0 (per init_layer)
    gamma = jnp.ones((Cout,), dtype=jnp.float32)
    beta = jnp.zeros((Cout,), dtype=jnp.float32)

    fwd = jax.jit(relation_conv_block, static_argnames=("padding", "row_tile"))
    out = fwd(x, w, bias, gamma, beta, padding=padding)
    out = jax.block_until_ready(out)

    ref = _reference(x, w, bias, gamma, beta, padding=padding)
    assert out.shape == (N, Cout, H - 2, W - 2), out.shape
    # bf16 MXU inputs with f32 accumulation -> slightly looser tolerance than pure f32
    max_err = float(jnp.max(jnp.abs(out - ref)))
    assert jnp.allclose(out, ref, atol=2e-2, rtol=2e-2), max_err

    print("KERNEL_OK")
</pallas_src>

<mosaic_0001>
module attributes {stable_mosaic.version = 11 : i64} {
  func.func @_conv_stats_kernel(%arg0: i32, %arg1: memref<256x36xbf16, #tpu.memory_space<vmem>>, %arg2: memref<36x128xbf16, #tpu.memory_space<vmem>>, %arg3: memref<1x1x128xf32, #tpu.memory_space<vmem>>, %arg4: memref<1x1x128xf32, #tpu.memory_space<vmem>>) attributes {dimension_semantics = [#tpu.dimension_semantics<parallel>], iteration_bounds = array<i64: 2>, scalar_prefetch = 0 : i64, scratch_operands = 0 : i64, tpu.core_type = #tpu.core_type<tc>, window_params = [{transform_indices = @transform_0, window_bounds = array<i64: 256, 36>}, {pipeline_mode = #tpu.pipeline_mode<synchronous>, transform_indices = @transform_1, window_bounds = array<i64: 36, 128>}, {transform_indices = @transform_2, window_bounds = array<i64: 1, 1, 128>}, {transform_indices = @transform_3, window_bounds = array<i64: 1, 1, 128>}]} {
    %c0 = arith.constant 0 : index
    %c0_0 = arith.constant 0 : index
    %0 = vector.load %arg1[%c0, %c0_0] : memref<256x36xbf16, #tpu.memory_space<vmem>>, vector<256x36xbf16>
    %c0_1 = arith.constant 0 : index
    %c0_2 = arith.constant 0 : index
    %1 = vector.load %arg2[%c0_1, %c0_2] : memref<36x128xbf16, #tpu.memory_space<vmem>>, vector<36x128xbf16>
    %cst = arith.constant dense<0.000000e+00> : vector<256x128xf32>
    %2 = tpu.matmul %0, %1, %cst {dimension_numbers = #tpu.dot_dimension_numbers<[1], [0], [0], [1], [0, 0, 1, 1], [], []>} : vector<256x36xbf16>, vector<36x128xbf16>, vector<256x128xf32> -> vector<256x128xf32>
    %cst_3 = arith.constant dense<0.000000e+00> : vector<128xf32>
    %3 = vector.multi_reduction <add>, %2, %cst_3 [0] : vector<256x128xf32> to vector<128xf32>
    %4 = vector.shape_cast %3 : vector<128xf32> to vector<1x128xf32>
    %c0_4 = arith.constant 0 : index
    %c0_5 = arith.constant 0 : index
    %c0_6 = arith.constant 0 : index
    %5 = vector.load %arg3[%c0_4, %c0_5, %c0_6] : memref<1x1x128xf32, #tpu.memory_space<vmem>>, vector<1x1x128xf32>
    %6 = vector.shape_cast %5 : vector<1x1x128xf32> to vector<1x128xf32>
    %7 = vector.shape_cast %4 : vector<1x128xf32> to vector<1x1x128xf32>
    tpu.vector_store %arg3[%c0_4, %c0_5, %c0_6], %7 {strides = array<i32>} : memref<1x1x128xf32, #tpu.memory_space<vmem>>, vector<1x1x128xf32>,
    %8 = arith.mulf %2, %2 : vector<256x128xf32>
    %cst_7 = arith.constant dense<0.000000e+00> : vector<128xf32>
    %9 = vector.multi_reduction <add>, %8, %cst_7 [0] : vector<256x128xf32> to vector<128xf32>
    %10 = vector.shape_cast %9 : vector<128xf32> to vector<1x128xf32>
    %c0_8 = arith.constant 0 : index
    %c0_9 = arith.constant 0 : index
    %c0_10 = arith.constant 0 : index
    %11 = vector.load %arg4[%c0_8, %c0_9, %c0_10] : memref<1x1x128xf32, #tpu.memory_space<vmem>>, vector<1x1x128xf32>
    %12 = vector.shape_cast %11 : vector<1x1x128xf32> to vector<1x128xf32>
    %13 = vector.shape_cast %10 : vector<1x128xf32> to vector<1x1x128xf32>
    tpu.vector_store %arg4[%c0_8, %c0_9, %c0_10], %13 {strides = array<i32>} : memref<1x1x128xf32, #tpu.memory_space<vmem>>, vector<1x1x128xf32>,
    return
  }
  func.func @transform_0(%arg0: i32) -> (i32, i32) {
    %c0_i32 = arith.constant 0 : i32
    %c0_i32_0 = arith.constant 0 : i32
    return %arg0, %c0_i32 : i32, i32
  }
  func.func @transform_1(%arg0: i32) -> (i32, i32) {
    %c0_i32 = arith.constant 0 : i32
    %c0_i32_0 = arith.constant 0 : i32
    %c0_i32_1 = arith.constant 0 : i32
    return %c0_i32, %c0_i32_0 : i32, i32
  }
  func.func @transform_2(%arg0: i32) -> (i32, i32, i32) {
    %c0_i32 = arith.constant 0 : i32
    %c0_i32_0 = arith.constant 0 : i32
    %c0_i32_1 = arith.constant 0 : i32
    return %arg0, %c0_i32, %c0_i32_0 : i32, i32, i32
  }
  func.func @transform_3(%arg0: i32) -> (i32, i32, i32) {
    %c0_i32 = arith.constant 0 : i32
    %c0_i32_0 = arith.constant 0 : i32
    %c0_i32_1 = arith.constant 0 : i32
    return %arg0, %c0_i32, %c0_i32_0 : i32, i32, i32
  }
}

module attributes {stable_mosaic.version = 11 : i64} {
  func.func @_conv_bn_relu_kernel(%arg0: i32, %arg1: memref<256x36xbf16, #tpu.memory_space<vmem>>, %arg2: memref<36x128xbf16, #tpu.memory_space<vmem>>, %arg3: memref<1x128xf32, #tpu.memory_space<vmem>>, %arg4: memref<1x128xf32, #tpu.memory_space<vmem>>, %arg5: memref<256x128xf32, #tpu.memory_space<vmem>>) attributes {dimension_semantics = [#tpu.dimension_semantics<parallel>], iteration_bounds = array<i64: 2>, scalar_prefetch = 0 : i64, scratch_operands = 0 : i64, tpu.core_type = #tpu.core_type<tc>, window_params = [{transform_indices = @transform_0, window_bounds = array<i64: 256, 36>}, {pipeline_mode = #tpu.pipeline_mode<synchronous>, transform_indices = @transform_1, window_bounds = array<i64: 36, 128>}, {pipeline_mode = #tpu.pipeline_mode<synchronous>, transform_indices = @transform_2, window_bounds = array<i64: 1, 128>}, {pipeline_mode = #tpu.pipeline_mode<synchronous>, transform_indices = @transform_3, window_bounds = array<i64: 1, 128>}, {transform_indices = @transform_4, window_bounds = array<i64: 256, 128>}]} {
    %c0 = arith.constant 0 : index
    %c0_0 = arith.constant 0 : index
    %0 = vector.load %arg1[%c0, %c0_0] : memref<256x36xbf16, #tpu.memory_space<vmem>>, vector<256x36xbf16>
    %c0_1 = arith.constant 0 : index
    %c0_2 = arith.constant 0 : index
    %1 = vector.load %arg2[%c0_1, %c0_2] : memref<36x128xbf16, #tpu.memory_space<vmem>>, vector<36x128xbf16>
    %cst = arith.constant dense<0.000000e+00> : vector<256x128xf32>
    %2 = tpu.matmul %0, %1, %cst {dimension_numbers = #tpu.dot_dimension_numbers<[1], [0], [0], [1], [0, 0, 1, 1], [], []>} : vector<256x36xbf16>, vector<36x128xbf16>, vector<256x128xf32> -> vector<256x128xf32>
    %c0_3 = arith.constant 0 : index
    %c0_4 = arith.constant 0 : index
    %3 = vector.load %arg3[%c0_3, %c0_4] : memref<1x128xf32, #tpu.memory_space<vmem>>, vector<1x128xf32>
    %4 = vector.broadcast %3 : vector<1x128xf32> to vector<256x128xf32>
    %5 = arith.mulf %2, %4 : vector<256x128xf32>
    %c0_5 = arith.constant 0 : index
    %c0_6 = arith.constant 0 : index
    %6 = vector.load %arg4[%c0_5, %c0_6] : memref<1x128xf32, #tpu.memory_space<vmem>>, vector<1x128xf32>
    %7 = vector.broadcast %6 : vector<1x128xf32> to vector<256x128xf32>
    %8 = arith.addf %5, %7 : vector<256x128xf32>
    %cst_7 = arith.constant 0.000000e+00 : f32
    %9 = vector.broadcast %cst_7 : f32 to vector<256x128xf32>
    %10 = arith.maximumf %8, %9 : vector<256x128xf32>
    %c0_8 = arith.constant 0 : index
    %c0_9 = arith.constant 0 : index
    %11 = vector.load %arg5[%c0_8, %c0_9] : memref<256x128xf32, #tpu.memory_space<vmem>>, vector<256x128xf32>
    tpu.vector_store %arg5[%c0_8, %c0_9], %10 {strides = array<i32>} : memref<256x128xf32, #tpu.memory_space<vmem>>, vector<256x128xf32>,
    return
  }
  func.func @transform_0(%arg0: i32) -> (i32, i32) {
    %c0_i32 = arith.constant 0 : i32
    %c0_i32_0 = arith.constant 0 : i32
    return %arg0, %c0_i32 : i32, i32
  }
  func.func @transform_1(%arg0: i32) -> (i32, i32) {
    %c0_i32 = arith.constant 0 : i32
    %c0_i32_0 = arith.constant 0 : i32
    %c0_i32_1 = arith.constant 0 : i32
    return %c0_i32, %c0_i32_0 : i32, i32
  }
  func.func @transform_2(%arg0: i32) -> (i32, i32) {
    %c0_i32 = arith.constant 0 : i32
    %c0_i32_0 = arith.constant 0 : i32
    %c0_i32_1 = arith.constant 0 : i32
    return %c0_i32, %c0_i32_0 : i32, i32
  }
  func.func @transform_3(%arg0: i32) -> (i32, i32) {
    %c0_i32 = arith.constant 0 : i32
    %c0_i32_0 = arith.constant 0 : i32
    %c0_i32_1 = arith.constant 0 : i32
    return %c0_i32, %c0_i32_0 : i32, i32
  }
  func.func @transform_4(%arg0: i32) -> (i32, i32) {
    %c0_i32 = arith.constant 0 : i32
    %c0_i32_0 = arith.constant 0 : i32
    return %arg0, %c0_i32 : i32, i32
  }
}

</mosaic_0001>

<llo_original>
// kernel: relation_conv_block.3
$region0: #{relation_conv_block.3}
  #allocation0 [shape = 'u32[]', space=smem, size = 0x4, offset = 0x4, fixed_abs, tag = 'smem constant byte address 0x4 - core index']
  #allocation1 [shape = 'u32[144,128]{1,0:T(1,128)}', space=vmem, size = 0x12000, scoped, tag = 'internal scratch']
  %s0 = inlined_call_operand.vmem [shape: bf16[512,36], index: 0, kind: input, shape index: {}]
  %s1 = inlined_call_operand.vmem [shape: bf16[36,128], index: 1, kind: input, shape index: {}]
  %s2 = inlined_call_operand.vmem [shape: f32[1,128], index: 2, kind: input, shape index: {}]
  %s3 = inlined_call_operand.vmem [shape: f32[1,128], index: 3, kind: input, shape index: {}]
  %s4 = inlined_call_operand.vmem [shape: f32[512,128], index: 4, kind: output, shape index: {}]
  %s5 = sld [smem:[#allocation0]]
  $region49: #{relation_conv_block.3} parent=0
    _
  %s7 = ssub.s32 1, %s5
  %s8 = scalar_select 0, %s7, %s5
  loop: start=0, step=1, limit=4
  $region2: #{relation_conv_block.3} parent=0 // loop_pre_header
    _
  $region3: #{relation_conv_block.3} parent=0 // loop_header
    %s10 = sphi 0, %s14
    %p11 = scmp.ge.s32.totalorder %s10, 4
    %s20 = sphi 0, %s22
    %s23 = sphi 0, %s20
    %s24 = sphi 0, %s23
    %s40 = sphi 0, %s24
    %s44 = sphi 0, %s44
    %s46 = sphi 0, %s44
    %s47 = sphi 0, %s46
    %s61 = sphi 0, %s47
    %s65 = sphi 0, %s65
    %s67 = sphi 0, %s65
    %s68 = sphi 0, %s67
    %s82 = sphi 0, %s68
    %s86 = sphi 0, %s86
    %s88 = sphi 0, %s86
    %s89 = sphi 0, %s88
    %s103 = sphi 0, %s89
    %s109 = sphi 0, %s111
    %s112 = sphi 0, %s109
    %s113 = sphi 0, %s112
    %s129 = sphi 0, %s113
  $region4: #{relation_conv_block.3} parent=0 // loop_header_branch
    %13 = sbr.rel (%p11) target = $region8
  $region5: #{relation_conv_block.3} parent=0 // loop_body
    %s15 = ssub.s32 %s10, 1
    %s16 = ssub.s32 %s10, 2
    %s17 = sadd.s32 %s10, 1
    %s18 = ssub.s32 %s10, %s17
    %p19 = scmp.eq.s32.totalorder %s18, 0
    %s21 = sadd.s32 %s20, 1
    %s22 = scalar_select %p19, %s20, %s21
    %p25 = pneg %p19
    %p26 = scmp.eq.s32.totalorder %s10, 1
    %p27 = por %p25, %p26
    %p28 = scmp.ne.s32.totalorder %s20, %s23
    %p29 = scmp.eq.s32.totalorder %s10, 0
    %p30 = por %p28, %p29
    %p31 = scmp.ne.s32.totalorder %s20, %s23
    %p32 = scmp.eq.s32.totalorder %s15, 1
    %p33 = por %p31, %p32
    %p34 = scmp.ne.s32.totalorder %s23, %s24
    %p35 = scmp.eq.s32.totalorder %s15, 0
    %p36 = por %p34, %p35
    %p37 = scmp.ne.s32.totalorder %s23, %s24
    %p38 = scmp.eq.s32.totalorder %s16, 1
    %p39 = por %p37, %p38
    %p41 = scmp.ne.s32.totalorder %s24, %s40
    %p42 = scmp.eq.s32.totalorder %s16, 0
    %p43 = por %p41, %p42
    %s45 = sadd.s32 %s44, 1
    %p48 = scmp.eq.s32.totalorder %s10, 1
    %p49 = scmp.ne.s32.totalorder %s44, %s46
    %p50 = scmp.eq.s32.totalorder %s10, 0
    %p51 = por %p49, %p50
    %p52 = scmp.ne.s32.totalorder %s44, %s46
    %p53 = scmp.eq.s32.totalorder %s15, 1
    %p54 = por %p52, %p53
    %p55 = scmp.ne.s32.totalorder %s46, %s47
    %p56 = scmp.eq.s32.totalorder %s15, 0
    %p57 = por %p55, %p56
    %p58 = scmp.ne.s32.totalorder %s46, %s47
    %p59 = scmp.eq.s32.totalorder %s16, 1
    %p60 = por %p58, %p59
    %p62 = scmp.ne.s32.totalorder %s47, %s61
    %p63 = scmp.eq.s32.totalorder %s16, 0
    %p64 = por %p62, %p63
    %s66 = sadd.s32 %s65, 1
    %p69 = scmp.eq.s32.totalorder %s10, 1
    %p70 = scmp.ne.s32.totalorder %s65, %s67
    %p71 = scmp.eq.s32.totalorder %s10, 0
    %p72 = por %p70, %p71
    %p73 = scmp.ne.s32.totalorder %s65, %s67
    %p74 = scmp.eq.s32.totalorder %s15, 1
    %p75 = por %p73, %p74
    %p76 = scmp.ne.s32.totalorder %s67, %s68
    %p77 = scmp.eq.s32.totalorder %s15, 0
    %p78 = por %p76, %p77
    %p79 = scmp.ne.s32.totalorder %s67, %s68
    %p80 = scmp.eq.s32.totalorder %s16, 1
    %p81 = por %p79, %p80
    %p83 = scmp.ne.s32.totalorder %s68, %s82
    %p84 = scmp.eq.s32.totalorder %s16, 0
    %p85 = por %p83, %p84
    %s87 = sadd.s32 %s86, 1
    %p90 = scmp.eq.s32.totalorder %s10, 1
    %p91 = scmp.ne.s32.totalorder %s86, %s88
    %p92 = scmp.eq.s32.totalorder %s10, 0
    %p93 = por %p91, %p92
    %p94 = scmp.ne.s32.totalorder %s86, %s88
    %p95 = scmp.eq.s32.totalorder %s15, 1
    %p96 = por %p94, %p95
    %p97 = scmp.ne.s32.totalorder %s88, %s89
    %p98 = scmp.eq.s32.totalorder %s15, 0
    %p99 = por %p97, %p98
    %p100 = scmp.ne.s32.totalorder %s88, %s89
    %p101 = scmp.eq.s32.totalorder %s16, 1
    %p102 = por %p100, %p101
    %p104 = scmp.ne.s32.totalorder %s89, %s103
    %p105 = scmp.eq.s32.totalorder %s16, 0
    %p106 = por %p104, %p105
    %s107 = ssub.s32 %s10, %s17
    %p108 = scmp.eq.s32.totalorder %s107, 0
    %s110 = sadd.s32 %s109, 1
    %s111 = scalar_select %p108, %s109, %s110
    %p114 = pneg %p108
    %p115 = scmp.eq.s32.totalorder %s10, 1
    %p116 = por %p114, %p115
    %p117 = scmp.ne.s32.totalorder %s109, %s112
    %p118 = scmp.eq.s32.totalorder %s10, 0
    %p119 = por %p117, %p118
    %p120 = scmp.ne.s32.totalorder %s109, %s112
    %p121 = scmp.eq.s32.totalorder %s15, 1
    %p122 = por %p120, %p121
    %p123 = scmp.ne.s32.totalorder %s112, %s113
    %p124 = scmp.eq.s32.totalorder %s15, 0
    %p125 = por %p123, %p124
    %p126 = scmp.ne.s32.totalorder %s112, %s113
    %p127 = scmp.eq.s32.totalorder %s16, 1
    %p128 = por %p126, %p127
    %p130 = scmp.ne.s32.totalorder %s113, %s129
    %p131 = scmp.eq.s32.totalorder %s16, 0
    %p132 = por %p130, %p131
    %p133 = scmp.le.s32.totalorder 1, %s10
    %p134 = scmp.lt.s32.totalorder %s10, 3
    %p135 = pnand %p133, %p134
    %p136 = pneg %p135
    // Predicated region
    $region9: #{relation_conv_block.3} parent=5 // pred_check
      _
    $region10: #{relation_conv_block.3} parent=5 // pred_check_branch
      %138 = sbr.rel (%p135) target = $region12
    $region11: #{relation_conv_block.3} parent=5 // pred_region
      %s139 = ssub.s32 %s10, 1
      // Predicated region
      $region13: #{relation_conv_block.3} parent=11 // pred_check
        %p140 = pneg %p57
      $region14: #{relation_conv_block.3} parent=11 // pred_check_branch
        %142 = sbr.rel (%p140) target = $region16
      $region15: #{relation_conv_block.3} parent=11 // pred_region
        _
      $region16: #{relation_conv_block.3} parent=11 // pred_fallthru
        _
      // Predicated region
      $region17: #{relation_conv_block.3} parent=11 // pred_check
        %p143 = pneg %p78
      $region18: #{relation_conv_block.3} parent=11 // pred_check_branch
        %145 = sbr.rel (%p143) target = $region20
      $region19: #{relation_conv_block.3} parent=11 // pred_region
        _
      $region20: #{relation_conv_block.3} parent=11 // pred_fallthru
        _
      // Predicated region
      $region21: #{relation_conv_block.3} parent=11 // pred_check
        %p146 = pneg %p99
      $region22: #{relation_conv_block.3} parent=11 // pred_check_branch
        %148 = sbr.rel (%p146) target = $region24
      $region23: #{relation_conv_block.3} parent=11 // pred_region
        _
      $region24: #{relation_conv_block.3} parent=11 // pred_fallthru
        _
    $region12: #{relation_conv_block.3} parent=5 // pred_fallthru
      _
    %p149 = scmp.lt.s32.totalorder %s10, 2
    // Predicated region
    $region25: #{relation_conv_block.3} parent=5 // pred_check
      %p150 = pneg %p149
    $region26: #{relation_conv_block.3} parent=5 // pred_check_branch
      %152 = sbr.rel (%p150) target = $region28
    $region27: #{relation_conv_block.3} parent=5 // pred_region
      // Predicated region
      $region29: #{relation_conv_block.3} parent=27 // pred_check
        %p153 = pneg %p30
      $region30: #{relation_conv_block.3} parent=27 // pred_check_branch
        %155 = sbr.rel (%p153) target = $region32
      $region31: #{relation_conv_block.3} parent=27 // pred_region
        %s156 = smul.u32 32, %s10
        %p157 = scmp.lt.s32.totalorder %s156, 63
        %s158 = scalar_select %p157, %s156, 63
        %s159 = smul.addr %s158, 4
        %s160 = scalar_lea.vmem %s0, %s159
        %s161 = smul.u32 32, %s10
      $region32: #{relation_conv_block.3} parent=27 // pred_fallthru
        _
    $region28: #{relation_conv_block.3} parent=5 // pred_fallthru
      _
    %p162 = scmp.le.s32.totalorder 1, %s10
    %p163 = scmp.lt.s32.totalorder %s10, 3
    %p164 = pnand %p162, %p163
    %p165 = pneg %p164
    // Predicated region
    $region33: #{relation_conv_block.3} parent=5 // pred_check
      _
    $region34: #{relation_conv_block.3} parent=5 // pred_check_branch
      %167 = sbr.rel (%p164) target = $region36
    $region35: #{relation_conv_block.3} parent=5 // pred_region
      %s168 = ssub.s32 %s10, 1
      %s169 = smul.u32 32, %s15
      %p170 = scmp.lt.s32.totalorder %s169, 63
      %s171 = scalar_select %p170, %s169, 63
      %s172 = smul.addr %s171, 4
      %s173 = scalar_lea.vmem %s0, %s172
      %p174 = pneg %p36
      %p175 = pneg %p33
      %p176 = pneg %p57
      %p177 = pneg %p54
      %p178 = pneg %p78
      %p179 = pneg %p75
      %p180 = pneg %p99
      %p181 = pneg %p96
      %p182 = pneg %p125
      %p183 = pneg %p122
      %s184 = smul.u32 32, %s15
      %p185 = scmp.lt.s32.totalorder %s184, 63
      %s186 = scalar_select %p185, %s184, 63
      %s187 = smul.addr %s186, 8
      %s188 = scalar_lea.vmem %s4, %s187
      %s189 = smul.u32 32, %s15
      %p190 = scmp.lt.s32.totalorder %s189, 63
      %s191 = scalar_select %p190, %s189, 63
      %s192 = smul.addr %s191, 4
      %s193 = scalar_lea.vmem %s0, %s192
      %s194 = smul.u32 32, %s15
      %s195 = smul.u32 32, %s15
      %p196 = scmp.lt.s32.totalorder %s195, 63
      %s197 = scalar_select %p196, %s195, 63
      %s198 = smul.addr %s197, 8
      %s199 = scalar_lea.vmem %s4, %s198
      %s200 = smul.u32 32, %s15
      %v202 = vld [vmem:[%s193] sm:$0xf]
      %v203 = vld [vmem:[%s193 + $0x4] sm:$0xf]
      %v204 = vld [vmem:[%s193 + $0x8] sm:$0xf]
      %v205 = vld [vmem:[%s193 + $0xc] sm:$0xf]
      %v206 = vld [vmem:[%s193 + $0x10] sm:$0xf]
      %v207 = vld [vmem:[%s193 + $0x14] sm:$0xf]
      %v208 = vld [vmem:[%s193 + $0x18] sm:$0xf]
      %v209 = vld [vmem:[%s193 + $0x1c] sm:$0xf]
      %v210 = vld [vmem:[%s193 + $0x20] sm:$0xf]
      %v211 = vld [vmem:[%s193 + $0x24] sm:$0xf]
      %v212 = vld [vmem:[%s193 + $0x28] sm:$0xf]
      %v213 = vld [vmem:[%s193 + $0x2c] sm:$0xf]
      %v214 = vld [vmem:[%s193 + $0x30] sm:$0xf]
      %v215 = vld [vmem:[%s193 + $0x34] sm:$0xf]
      %v216 = vld [vmem:[%s193 + $0x38] sm:$0xf]
      %v217 = vld [vmem:[%s193 + $0x3c] sm:$0xf]
      %v218 = vld [vmem:[%s193 + $0x40] sm:$0xf]
      %v219 = vld [vmem:[%s193 + $0x44] sm:$0xf]
      %v220 = vld [vmem:[%s193 + $0x48] sm:$0xf]
      %v221 = vld [vmem:[%s193 + $0x4c] sm:$0xf]
      %v222 = vld [vmem:[%s193 + $0x50] sm:$0xf]
      %v223 = vld [vmem:[%s193 + $0x54] sm:$0xf]
      %v224 = vld [vmem:[%s193 + $0x58] sm:$0xf]
      %v225 = vld [vmem:[%s193 + $0x5c] sm:$0xf]
      %v226 = vld [vmem:[%s193 + $0x60] sm:$0xf]
      %v227 = vld [vmem:[%s193 + $0x64] sm:$0xf]
      %v228 = vld [vmem:[%s193 + $0x68] sm:$0xf]
      %v229 = vld [vmem:[%s193 + $0x6c] sm:$0xf]
      %v230 = vld [vmem:[%s193 + $0x70] sm:$0xf]
      %v231 = vld [vmem:[%s193 + $0x74] sm:$0xf]
      %v232 = vld [vmem:[%s193 + $0x78] sm:$0xf]
      %v233 = vld [vmem:[%s193 + $0x7c] sm:$0xf]
      %v234 = vld [vmem:[%s1] sm:$0xf]
      %v235 = vld [vmem:[%s1 + $0x4] sm:$0xf]
      %v236 = vld [vmem:[%s1 + $0x8] sm:$0xf]
      %v237 = vld [vmem:[%s1 + $0xc] sm:$0xf]
      %v238 = vld [vmem:[%s1 + $0x10] sm:$0x3]
      %v271 = vunpack.c.l.b16 %v202
      %v272 = vunpack.c.l.b16 %v203
      %v273 = vunpack.c.l.b16 %v204
      %v274 = vunpack.c.l.b16 %v205
      %v275 = vunpack.c.l.b16 %v206
      %v276 = vunpack.c.l.b16 %v207
      %v277 = vunpack.c.l.b16 %v208
      %v278 = vunpack.c.l.b16 %v209
      %v279 = vunpack.c.l.b16 %v210
      %v280 = vunpack.c.l.b16 %v211
      %v281 = vunpack.c.l.b16 %v212
      %v282 = vunpack.c.l.b16 %v213
      %v283 = vunpack.c.l.b16 %v214
      %v284 = vunpack.c.l.b16 %v215
      %v285 = vunpack.c.l.b16 %v216
      %v286 = vunpack.c.l.b16 %v217
      %v287 = vunpack.c.l.b16 %v218
      %v288 = vunpack.c.l.b16 %v219
      %v289 = vunpack.c.l.b16 %v220
      %v290 = vunpack.c.l.b16 %v221
      %v291 = vunpack.c.l.b16 %v222
      %v292 = vunpack.c.l.b16 %v223
      %v293 = vunpack.c.l.b16 %v224
      %v294 = vunpack.c.l.b16 %v225
      %v295 = vunpack.c.l.b16 %v226
      %v296 = vunpack.c.l.b16 %v227
      %v297 = vunpack.c.l.b16 %v228
      %v298 = vunpack.c.l.b16 %v229
      %v299 = vunpack.c.l.b16 %v230
      %v300 = vunpack.c.l.b16 %v231
      %v301 = vunpack.c.l.b16 %v232
      %v302 = vunpack.c.l.b16 %v233
      %v303 = vpack.c.b16 %v272, %v271
      %v304 = vpack.c.b16 %v274, %v273
      %v305 = vpack.c.b16 %v276, %v275
      %v306 = vpack.c.b16 %v278, %v277
      %v307 = vpack.c.b16 %v280, %v279
      %v308 = vpack.c.b16 %v282, %v281
      %v309 = vpack.c.b16 %v284, %v283
      %v310 = vpack.c.b16 %v286, %v285
      %v311 = vpack.c.b16 %v288, %v287
      %v312 = vpack.c.b16 %v290, %v289
      %v313 = vpack.c.b16 %v292, %v291
      %v314 = vpack.c.b16 %v294, %v293
      %v315 = vpack.c.b16 %v296, %v295
      %v316 = vpack.c.b16 %v298, %v297
      %v317 = vpack.c.b16 %v300, %v299
      %v318 = vpack.c.b16 %v302, %v301
      %v324 = vunpack.c.l.b16 %v234
      %v325 = vunpack.c.l.b16 %v235
      %v326 = vunpack.c.l.b16 %v236
      %v327 = vunpack.c.l.b16 %v237
      %v328 = vunpack.c.l.b16 %v238
      %v329 = vpack.c.b16 %v325, %v324
      %v330 = vpack.c.b16 %v327, %v326
      %v331 = vpack.c.b16 %v328, %v328
      %vm334 = vcmask 293888
      %v336 = vsel %vm334, %v303, 0
      %v339 = vsel %vm334, %v304, 0
      %v342 = vsel %vm334, %v305, 0
      %v345 = vsel %vm334, %v306, 0
      %v348 = vsel %vm334, %v307, 0
      %v351 = vsel %vm334, %v308, 0
      %v354 = vsel %vm334, %v309, 0
      %v357 = vsel %vm334, %v310, 0
      %v360 = vsel %vm334, %v311, 0
      %v363 = vsel %vm334, %v312, 0
      %v366 = vsel %vm334, %v313, 0
      %v369 = vsel %vm334, %v314, 0
      %v372 = vsel %vm334, %v315, 0
      %v375 = vsel %vm334, %v316, 0
      %v378 = vsel %vm334, %v317, 0
      %v381 = vsel %vm334, %v318, 0
      %vm383 = vcmask 1041408
      %v385 = vsel %vm383, %v331, 0
      %387 = vmatprep.subr.bf16.mxu0 0
      %388 = vmatpush1.bf16.msra.mxu0 0
      %389 = vmatprep.subr.bf16.mxu0 0
      %390 = vmatpush1.bf16.msra.mxu0 0
      %391 = vmatprep.subr.bf16.mxu0 0
      %392 = vmatpush1.bf16.msra.mxu0 0
      %393 = vmatprep.subr.bf16.mxu0 0
      %394 = vmatpush1.bf16.msra.mxu0 0
      %395 = vmatprep.subr.bf16.mxu0 0
      %396 = vmatpush1.bf16.msra.mxu0 0
      %397 = vmatprep.subr.bf16.mxu0 0
      %398 = vmatpush1.bf16.msra.mxu0 %v385
      %399 = vmatprep.subr.bf16.mxu0 0
      %400 = vmatpush1.bf16.msra.mxu0 %v330
      %401 = vmatprep.subr.bf16.mxu0 0
      %402 = vmatpush1.bf16.msra.mxu0 %v329
      %403 = vmatprep.subr.bf16.mxu0 0
      %404 = vmatpush2.bf16.msra.mxu0 0
      %405 = vmatprep.subr.bf16.mxu0 0
      %406 = vmatpush2.bf16.msra.mxu0 0
      %407 = vmatprep.subr.bf16.mxu0 0
      %408 = vmatpush2.bf16.msra.mxu0 0
      %409 = vmatprep.subr.bf16.mxu0 0
      %410 = vmatpush2.bf16.msra.mxu0 0
      %411 = vmatprep.subr.bf16.mxu0 0
      %412 = vmatpush2.bf16.msra.mxu0 0
      %413 = vmatprep.subr.bf16.mxu0 0
      %414 = vmatpush2.bf16.msra.mxu0 0
      %415 = vmatprep.subr.bf16.mxu0 0
      %416 = vmatpush2.bf16.msra.mxu0 0
      %417 = vmatprep.subr.bf16.mxu0 0
      %418 = vmatpush2.bf16.msra.mxu0 0
      %419 = vmatprep.mubr.bf16.mxu0 0
      %420 = vmatmul.mubr.bf16.gmra.mxu0 %v336
      %v421 = vpop.f32.mrf.mxu0
      %v422 = vadd.f32 0.0, %v421
      %v423 = vpop.f32.mrf.mxu0
      %v424 = vpop.f32.mrf.mxu0
      %v425 = vadd.f32 0.0, %v424
      %v426 = vpop.f32.mrf.mxu0
      %427 = vmatprep.mubr.bf16.mxu0 0
      %428 = vmatmul.mubr.bf16.gmra.mxu0 %v339
      %v429 = vpop.f32.mrf.mxu0
      %v430 = vadd.f32 0.0, %v429
      %v431 = vpop.f32.mrf.mxu0
      %v432 = vpop.f32.mrf.mxu0
      %v433 = vadd.f32 0.0, %v432
      %v434 = vpop.f32.mrf.mxu0
      %435 = vmatprep.mubr.bf16.mxu0 0
      %436 = vmatmul.mubr.bf16.gmra.mxu0 %v342
      %v437 = vpop.f32.mrf.mxu0
      %v438 = vadd.f32 0.0, %v437
      %v439 = vpop.f32.mrf.mxu0
      %v440 = vpop.f32.mrf.mxu0
      %v441 = vadd.f32 0.0, %v440
      %v442 = vpop.f32.mrf.mxu0
      %443 = vmatprep.mubr.bf16.mxu0 0
      %444 = vmatmul.mubr.bf16.gmra.mxu0 %v345
      %v445 = vpop.f32.mrf.mxu0
      %v446 = vadd.f32 0.0, %v445
      %v447 = vpop.f32.mrf.mxu0
      %v448 = vpop.f32.mrf.mxu0
      %v449 = vadd.f32 0.0, %v448
      %v450 = vpop.f32.mrf.mxu0
      %451 = vmatprep.mubr.bf16.mxu0 0
      %452 = vmatmul.mubr.bf16.gmra.mxu0 %v348
      %v453 = vpop.f32.mrf.mxu0
      %v454 = vadd.f32 0.0, %v453
      %v455 = vpop.f32.mrf.mxu0
      %v456 = vpop.f32.mrf.mxu0
      %v457 = vadd.f32 0.0, %v456
      %v458 = vpop.f32.mrf.mxu0
      %459 = vmatprep.mubr.bf16.mxu0 0
      %460 = vmatmul.mubr.bf16.gmra.mxu0 %v351
      %v461 = vpop.f32.mrf.mxu0
      %v462 = vadd.f32 0.0, %v461
      %v463 = vpop.f32.mrf.mxu0
      %v464 = vpop.f32.mrf.mxu0
      %v465 = vadd.f32 0.0, %v464
      %v466 = vpop.f32.mrf.mxu0
      %467 = vmatprep.mubr.bf16.mxu0 0
      %468 = vmatmul.mubr.bf16.gmra.mxu0 %v354
      %v469 = vpop.f32.mrf.mxu0
      %v470 = vadd.f32 0.0, %v469
      %v471 = vpop.f32.mrf.mxu0
      %v472 = vpop.f32.mrf.mxu0
      %v473 = vadd.f32 0.0, %v472
      %v474 = vpop.f32.mrf.mxu0
      %475 = vmatprep.mubr.bf16.mxu0 0
      %476 = vmatmul.mubr.bf16.gmra.mxu0 %v357
      %v477 = vpop.f32.mrf.mxu0
      %v478 = vadd.f32 0.0, %v477
      %v479 = vpop.f32.mrf.mxu0
      %v480 = vpop.f32.mrf.mxu0
      %v481 = vadd.f32 0.0, %v480
      %v482 = vpop.f32.mrf.mxu0
      %483 = vmatprep.mubr.bf16.mxu0 0
      %484 = vmatmul.mubr.bf16.gmra.mxu0 %v360
      %v485 = vpop.f32.mrf.mxu0
      %v486 = vadd.f32 0.0, %v485
      %v487 = vpop.f32.mrf.mxu0
      %v488 = vpop.f32.mrf.mxu0
      %v489 = vadd.f32 0.0, %v488
      %v490 = vpop.f32.mrf.mxu0
      %491 = vmatprep.mubr.bf16.mxu0 0
      %492 = vmatmul.mubr.bf16.gmra.mxu0 %v363
      %v493 = vpop.f32.mrf.mxu0
      %v494 = vadd.f32 0.0, %v493
      %v495 = vpop.f32.mrf.mxu0
      %v496 = vpop.f32.mrf.mxu0
      %v497 = vadd.f32 0.0, %v496
      %v498 = vpop.f32.mrf.mxu0
      %499 = vmatprep.mubr.bf16.mxu0 0
      %500 = vmatmul.mubr.bf16.gmra.mxu0 %v366
      %v501 = vpop.f32.mrf.mxu0
      %v502 = vadd.f32 0.0, %v501
      %v503 = vpop.f32.mrf.mxu0
      %v504 = vpop.f32.mrf.mxu0
      %v505 = vadd.f32 0.0, %v504
      %v506 = vpop.f32.mrf.mxu0
      %507 = vmatprep.mubr.bf16.mxu0 0
      %508 = vmatmul.mubr.bf16.gmra.mxu0 %v369
      %v509 = vpop.f32.mrf.mxu0
      %v510 = vadd.f32 0.0, %v509
      %v511 = vpop.f32.mrf.mxu0
      %v512 = vpop.f32.mrf.mxu0
      %v513 = vadd.f32 0.0, %v512
      %v514 = vpop.f32.mrf.mxu0
      %515 = vmatprep.mubr.bf16.mxu0 0
      %516 = vmatmul.mubr.bf16.gmra.mxu0 %v372
      %v517 = vpop.f32.mrf.mxu0
      %v518 = vadd.f32 0.0, %v517
      %v519 = vpop.f32.mrf.mxu0
      %v520 = vpop.f32.mrf.mxu0
      %v521 = vadd.f32 0.0, %v520
      %v522 = vpop.f32.mrf.mxu0
      %523 = vmatprep.mubr.bf16.mxu0 0
      %524 = vmatmul.mubr.bf16.gmra.mxu0 %v375
      %v525 = vpop.f32.mrf.mxu0
      %v526 = vadd.f32 0.0, %v525
      %v527 = vpop.f32.mrf.mxu0
      %v528 = vpop.f32.mrf.mxu0
      %v529 = vadd.f32 0.0, %v528
      %v530 = vpop.f32.mrf.mxu0
      %531 = vmatprep.mubr.bf16.mxu0 0
      %532 = vmatmul.mubr.bf16.gmra.mxu0 %v378
      %v533 = vpop.f32.mrf.mxu0
      %v534 = vadd.f32 0.0, %v533
      %v535 = vpop.f32.mrf.mxu0
      %v536 = vpop.f32.mrf.mxu0
      %v537 = vadd.f32 0.0, %v536
      %v538 = vpop.f32.mrf.mxu0
      %539 = vmatprep.mubr.bf16.mxu0 0
      %540 = vmatmul.mubr.bf16.gmra.mxu0 %v381
      %v541 = vpop.f32.mrf.mxu0
      %v542 = vadd.f32 0.0, %v541
      %v543 = vpop.f32.mrf.mxu0
      %v544 = vpop.f32.mrf.mxu0
      %v545 = vadd.f32 0.0, %v544
      %v546 = vpop.f32.mrf.mxu0
      %547 = vdwg.mxu0
      %v548 = vld [vmem:[%s2] sm:$0x1]
      %v550 = vlaneseq
      %v551 = vshrl.u32 %v550, 7
      %v552 = vsub.s32 0, %v551
      %v553 = vrot.slane %v548, %v552
      %v555 = vmul.f32 %v422, %v553
      %v556 = vmul.f32 %v425, %v553
      %v557 = vmul.f32 %v430, %v553
      %v558 = vmul.f32 %v433, %v553
      %v559 = vmul.f32 %v438, %v553
      %v560 = vmul.f32 %v441, %v553
      %v561 = vmul.f32 %v446, %v553
      %v562 = vmul.f32 %v449, %v553
      %v563 = vmul.f32 %v454, %v553
      %v564 = vmul.f32 %v457, %v553
      %v565 = vmul.f32 %v462, %v553
      %v566 = vmul.f32 %v465, %v553
      %v567 = vmul.f32 %v470, %v553
      %v568 = vmul.f32 %v473, %v553
      %v569 = vmul.f32 %v478, %v553
      %v570 = vmul.f32 %v481, %v553
      %v571 = vmul.f32 %v486, %v553
      %v572 = vmul.f32 %v489, %v553
      %v573 = vmul.f32 %v494, %v553
      %v574 = vmul.f32 %v497, %v553
      %v575 = vmul.f32 %v502, %v553
      %v576 = vmul.f32 %v505, %v553
      %v577 = vmul.f32 %v510, %v553
      %v578 = vmul.f32 %v513, %v553
      %v579 = vmul.f32 %v518, %v553
      %v580 = vmul.f32 %v521, %v553
      %v581 = vmul.f32 %v526, %v553
      %v582 = vmul.f32 %v529, %v553
      %v583 = vmul.f32 %v534, %v553
      %v584 = vmul.f32 %v537, %v553
      %v585 = vmul.f32 %v542, %v553
      %v586 = vmul.f32 %v545, %v553
      %v587 = vld [vmem:[%s3] sm:$0x1]
      %v589 = vlaneseq
      %v590 = vshrl.u32 %v589, 7
      %v591 = vsub.s32 0, %v590
      %v592 = vrot.slane %v587, %v591
      %v594 = vadd.f32 %v555, %v592
      %v595 = vadd.f32 %v556, %v592
      %v596 = vadd.f32 %v557, %v592
      %v597 = vadd.f32 %v558, %v592
      %v598 = vadd.f32 %v559, %v592
      %v599 = vadd.f32 %v560, %v592
      %v600 = vadd.f32 %v561, %v592
      %v601 = vadd.f32 %v562, %v592
      %v602 = vadd.f32 %v563, %v592
      %v603 = vadd.f32 %v564, %v592
      %v604 = vadd.f32 %v565, %v592
      %v605 = vadd.f32 %v566, %v592
      %v606 = vadd.f32 %v567, %v592
      %v607 = vadd.f32 %v568, %v592
      %v608 = vadd.f32 %v569, %v592
      %v609 = vadd.f32 %v570, %v592
      %v610 = vadd.f32 %v571, %v592
      %v611 = vadd.f32 %v572, %v592
      %v612 = vadd.f32 %v573, %v592
      %v613 = vadd.f32 %v574, %v592
      %v614 = vadd.f32 %v575, %v592
      %v615 = vadd.f32 %v576, %v592
      %v616 = vadd.f32 %v577, %v592
      %v617 = vadd.f32 %v578, %v592
      %v618 = vadd.f32 %v579, %v592
      %v619 = vadd.f32 %v580, %v592
      %v620 = vadd.f32 %v581, %v592
      %v621 = vadd.f32 %v582, %v592
      %v622 = vadd.f32 %v583, %v592
      %v623 = vadd.f32 %v584, %v592
      %v624 = vadd.f32 %v585, %v592
      %v625 = vadd.f32 %v586, %v592
      %v626 = vmax.f32 %v594, 0.0
      %v627 = vmax.f32 %v595, 0.0
      %v628 = vmax.f32 %v596, 0.0
      %v629 = vmax.f32 %v597, 0.0
      %v630 = vmax.f32 %v598, 0.0
      %v631 = vmax.f32 %v599, 0.0
      %v632 = vmax.f32 %v600, 0.0
      %v633 = vmax.f32 %v601, 0.0
      %v634 = vmax.f32 %v602, 0.0
      %v635 = vmax.f32 %v603, 0.0
      %v636 = vmax.f32 %v604, 0.0
      %v637 = vmax.f32 %v605, 0.0
      %v638 = vmax.f32 %v606, 0.0
      %v639 = vmax.f32 %v607, 0.0
      %v640 = vmax.f32 %v608, 0.0
      %v641 = vmax.f32 %v609, 0.0
      %v642 = vmax.f32 %v610, 0.0
      %v643 = vmax.f32 %v611, 0.0
      %v644 = vmax.f32 %v612, 0.0
      %v645 = vmax.f32 %v613, 0.0
      %v646 = vmax.f32 %v614, 0.0
      %v647 = vmax.f32 %v615, 0.0
      %v648 = vmax.f32 %v616, 0.0
      %v649 = vmax.f32 %v617, 0.0
      %v650 = vmax.f32 %v618, 0.0
      %v651 = vmax.f32 %v619, 0.0
      %v652 = vmax.f32 %v620, 0.0
      %v653 = vmax.f32 %v621, 0.0
      %v654 = vmax.f32 %v622, 0.0
      %v655 = vmax.f32 %v623, 0.0
      %v656 = vmax.f32 %v624, 0.0
      %v657 = vmax.f32 %v625, 0.0
      %658 = vst [vmem:[%s199] sm:$0xff] %v626
      %659 = vst [vmem:[%s199 + $0x8] sm:$0xff] %v627
      %660 = vst [vmem:[%s199 + $0x10] sm:$0xff] %v628
      %661 = vst [vmem:[%s199 + $0x18] sm:$0xff] %v629
      %662 = vst [vmem:[%s199 + $0x20] sm:$0xff] %v630
      %663 = vst [vmem:[%s199 + $0x28] sm:$0xff] %v631
      %664 = vst [vmem:[%s199 + $0x30] sm:$0xff] %v632
      %665 = vst [vmem:[%s199 + $0x38] sm:$0xff] %v633
      %666 = vst [vmem:[%s199 + $0x40] sm:$0xff] %v634
      %667 = vst [vmem:[%s199 + $0x48] sm:$0xff] %v635
      %668 = vst [vmem:[%s199 + $0x50] sm:$0xff] %v636
      %669 = vst [vmem:[%s199 + $0x58] sm:$0xff] %v637
      %670 = vst [vmem:[%s199 + $0x60] sm:$0xff] %v638
      %671 = vst [vmem:[%s199 + $0x68] sm:$0xff] %v639
      %672 = vst [vmem:[%s199 + $0x70] sm:$0xff] %v640
      %673 = vst [vmem:[%s199 + $0x78] sm:$0xff] %v641
      %674 = vst [vmem:[%s199 + $0x80] sm:$0xff] %v642
      %675 = vst [vmem:[%s199 + $0x88] sm:$0xff] %v643
      %676 = vst [vmem:[%s199 + $0x90] sm:$0xff] %v644
      %677 = vst [vmem:[%s199 + $0x98] sm:$0xff] %v645
      %678 = vst [vmem:[%s199 + $0xa0] sm:$0xff] %v646
      %679 = vst [vmem:[%s199 + $0xa8] sm:$0xff] %v647
      %680 = vst [vmem:[%s199 + $0xb0] sm:$0xff] %v648
      %681 = vst [vmem:[%s199 + $0xb8] sm:$0xff] %v649
      %682 = vst [vmem:[%s199 + $0xc0] sm:$0xff] %v650
      %683 = vst [vmem:[%s199 + $0xc8] sm:$0xff] %v651
      %684 = vst [vmem:[%s199 + $0xd0] sm:$0xff] %v652
      %685 = vst [vmem:[%s199 + $0xd8] sm:$0xff] %v653
      %686 = vst [vmem:[%s199 + $0xe0] sm:$0xff] %v654
      %687 = vst [vmem:[%s199 + $0xe8] sm:$0xff] %v655
      %688 = vst [vmem:[%s199 + $0xf0] sm:$0xff] %v656
      %689 = vst [vmem:[%s199 + $0xf8] sm:$0xff] %v657
      %s690 = smul.u32 32, %s15
      %p691 = scmp.lt.s32.totalorder %s690, 63
      %s692 = scalar_select %p691, %s690, 63
      %s693 = smul.addr %s692, 8
      %s694 = scalar_lea.vmem %s4, %s693
      // Predicated region
      $region37: #{relation_conv_block.3} parent=35 // pred_check
        %p695 = pneg %p122
      $region38: #{relation_conv_block.3} parent=35 // pred_check_branch
        %697 = sbr.rel (%p695) target = $region40
      $region39: #{relation_conv_block.3} parent=35 // pred_region
        %s698 = smul.u32 32, %s15
      $region40: #{relation_conv_block.3} parent=35 // pred_fallthru
        _
    $region36: #{relation_conv_block.3} parent=5 // pred_fallthru
      _
    %p699 = scmp.le.s32.totalorder 2, %s10
    // Predicated region
    $region41: #{relation_conv_block.3} parent=5 // pred_check
      %p700 = pneg %p699
    $region42: #{relation_conv_block.3} parent=5 // pred_check_branch
      %702 = sbr.rel (%p700) target = $region44
    $region43: #{relation_conv_block.3} parent=5 // pred_region
      %s703 = ssub.s32 %s10, 2
      // Predicated region
      $region45: #{relation_conv_block.3} parent=43 // pred_check
        %p704 = pneg %p128
      $region46: #{relation_conv_block.3} parent=43 // pred_check_branch
        %706 = sbr.rel (%p704) target = $region48
      $region47: #{relation_conv_block.3} parent=43 // pred_region
        %s707 = smul.u32 32, %s16
        %p708 = scmp.lt.s32.totalorder %s707, 63
        %s709 = scalar_select %p708, %s707, 63
        %s710 = smul.addr %s709, 8
        %s711 = scalar_lea.vmem %s4, %s710
      $region48: #{relation_conv_block.3} parent=43 // pred_fallthru
        _
    $region44: #{relation_conv_block.3} parent=5 // pred_fallthru
      _
  $region6: #{relation_conv_block.3} parent=0 // loop_footer
    %s14 = sadd.s32 1, %s10
  $region7: #{relation_conv_block.3} parent=0 // loop_footer_branch
    %9 = sbr.rel target = $region3
  $region8: #{relation_conv_block.3} parent=0 // loop_exit
    _

// kernel: relation_conv_block.2
$region0: #{relation_conv_block.2}
  #allocation0 [shape = 'u32[]', space=smem, size = 0x4, offset = 0x4, fixed_abs, tag = 'smem constant byte address 0x4 - core index']
  #allocation1 [shape = 'u32[144,128]{1,0:T(1,128)}', space=vmem, size = 0x12000, scoped, tag = 'internal scratch']
  %s0 = inlined_call_operand.vmem [shape: bf16[512,36], index: 0, kind: input, shape index: {}]
  %s1 = inlined_call_operand.vmem [shape: bf16[36,128], index: 1, kind: input, shape index: {}]
  %s2 = inlined_call_operand.vmem [shape: f32[2,1,128], index: 2, kind: output, shape index: {0}]
  %s3 = inlined_call_operand.vmem [shape: f32[2,1,128], index: 3, kind: output, shape index: {1}]
  %4 = xla_tuple %s2, %s3
  %s5 = sld [smem:[#allocation0]]
  $region49: #{relation_conv_block.2} parent=0
    _
  %s7 = ssub.s32 1, %s5
  %s8 = scalar_select 0, %s7, %s5
  loop: start=0, step=1, limit=4
  $region2: #{relation_conv_block.2} parent=0 // loop_pre_header
    _
  $region3: #{relation_conv_block.2} parent=0 // loop_header
    %s10 = sphi 0, %s14
    %p11 = scmp.ge.s32.totalorder %s10, 4
    %s20 = sphi 0, %s22
    %s23 = sphi 0, %s20
    %s24 = sphi 0, %s23
    %s40 = sphi 0, %s24
    %s44 = sphi 0, %s44
    %s46 = sphi 0, %s44
    %s47 = sphi 0, %s46
    %s61 = sphi 0, %s47
    %s67 = sphi 0, %s69
    %s70 = sphi 0, %s67
    %s71 = sphi 0, %s70
    %s87 = sphi 0, %s71
    %s93 = sphi 0, %s95
    %s96 = sphi 0, %s93
    %s97 = sphi 0, %s96
    %s113 = sphi 0, %s97
  $region4: #{relation_conv_block.2} parent=0 // loop_header_branch
    %13 = sbr.rel (%p11) target = $region8
  $region5: #{relation_conv_block.2} parent=0 // loop_body
    %s15 = ssub.s32 %s10, 1
    %s16 = ssub.s32 %s10, 2
    %s17 = sadd.s32 %s10, 1
    %s18 = ssub.s32 %s10, %s17
    %p19 = scmp.eq.s32.totalorder %s18, 0
    %s21 = sadd.s32 %s20, 1
    %s22 = scalar_select %p19, %s20, %s21
    %p25 = pneg %p19
    %p26 = scmp.eq.s32.totalorder %s10, 1
    %p27 = por %p25, %p26
    %p28 = scmp.ne.s32.totalorder %s20, %s23
    %p29 = scmp.eq.s32.totalorder %s10, 0
    %p30 = por %p28, %p29
    %p31 = scmp.ne.s32.totalorder %s20, %s23
    %p32 = scmp.eq.s32.totalorder %s15, 1
    %p33 = por %p31, %p32
    %p34 = scmp.ne.s32.totalorder %s23, %s24
    %p35 = scmp.eq.s32.totalorder %s15, 0
    %p36 = por %p34, %p35
    %p37 = scmp.ne.s32.totalorder %s23, %s24
    %p38 = scmp.eq.s32.totalorder %s16, 1
    %p39 = por %p37, %p38
    %p41 = scmp.ne.s32.totalorder %s24, %s40
    %p42 = scmp.eq.s32.totalorder %s16, 0
    %p43 = por %p41, %p42
    %s45 = sadd.s32 %s44, 1
    %p48 = scmp.eq.s32.totalorder %s10, 1
    %p49 = scmp.ne.s32.totalorder %s44, %s46
    %p50 = scmp.eq.s32.totalorder %s10, 0
    %p51 = por %p49, %p50
    %p52 = scmp.ne.s32.totalorder %s44, %s46
    %p53 = scmp.eq.s32.totalorder %s15, 1
    %p54 = por %p52, %p53
    %p55 = scmp.ne.s32.totalorder %s46, %s47
    %p56 = scmp.eq.s32.totalorder %s15, 0
    %p57 = por %p55, %p56
    %p58 = scmp.ne.s32.totalorder %s46, %s47
    %p59 = scmp.eq.s32.totalorder %s16, 1
    %p60 = por %p58, %p59
    %p62 = scmp.ne.s32.totalorder %s47, %s61
    %p63 = scmp.eq.s32.totalorder %s16, 0
    %p64 = por %p62, %p63
    %s65 = ssub.s32 %s10, %s17
    %p66 = scmp.eq.s32.totalorder %s65, 0
    %s68 = sadd.s32 %s67, 1
    %s69 = scalar_select %p66, %s67, %s68
    %p72 = pneg %p66
    %p73 = scmp.eq.s32.totalorder %s10, 1
    %p74 = por %p72, %p73
    %p75 = scmp.ne.s32.totalorder %s67, %s70
    %p76 = scmp.eq.s32.totalorder %s10, 0
    %p77 = por %p75, %p76
    %p78 = scmp.ne.s32.totalorder %s67, %s70
    %p79 = scmp.eq.s32.totalorder %s15, 1
    %p80 = por %p78, %p79
    %p81 = scmp.ne.s32.totalorder %s70, %s71
    %p82 = scmp.eq.s32.totalorder %s15, 0
    %p83 = por %p81, %p82
    %p84 = scmp.ne.s32.totalorder %s70, %s71
    %p85 = scmp.eq.s32.totalorder %s16, 1
    %p86 = por %p84, %p85
    %p88 = scmp.ne.s32.totalorder %s71, %s87
    %p89 = scmp.eq.s32.totalorder %s16, 0
    %p90 = por %p88, %p89
    %s91 = ssub.s32 %s10, %s17
    %p92 = scmp.eq.s32.totalorder %s91, 0
    %s94 = sadd.s32 %s93, 1
    %s95 = scalar_select %p92, %s93, %s94
    %p98 = pneg %p92
    %p99 = scmp.eq.s32.totalorder %s10, 1
    %p100 = por %p98, %p99
    %p101 = scmp.ne.s32.totalorder %s93, %s96
    %p102 = scmp.eq.s32.totalorder %s10, 0
    %p103 = por %p101, %p102
    %p104 = scmp.ne.s32.totalorder %s93, %s96
    %p105 = scmp.eq.s32.totalorder %s15, 1
    %p106 = por %p104, %p105
    %p107 = scmp.ne.s32.totalorder %s96, %s97
    %p108 = scmp.eq.s32.totalorder %s15, 0
    %p109 = por %p107, %p108
    %p110 = scmp.ne.s32.totalorder %s96, %s97
    %p111 = scmp.eq.s32.totalorder %s16, 1
    %p112 = por %p110, %p111
    %p114 = scmp.ne.s32.totalorder %s97, %s113
    %p115 = scmp.eq.s32.totalorder %s16, 0
    %p116 = por %p114, %p115
    %p117 = scmp.le.s32.totalorder 1, %s10
    %p118 = scmp.lt.s32.totalorder %s10, 3
    %p119 = pnand %p117, %p118
    %p120 = pneg %p119
    // Predicated region
    $region9: #{relation_conv_block.2} parent=5 // pred_check
      _
    $region10: #{relation_conv_block.2} parent=5 // pred_check_branch
      %122 = sbr.rel (%p119) target = $region12
    $region11: #{relation_conv_block.2} parent=5 // pred_region
      %s123 = ssub.s32 %s10, 1
      // Predicated region
      $region13: #{relation_conv_block.2} parent=11 // pred_check
        %p124 = pneg %p57
      $region14: #{relation_conv_block.2} parent=11 // pred_check_branch
        %126 = sbr.rel (%p124) target = $region16
      $region15: #{relation_conv_block.2} parent=11 // pred_region
        _
      $region16: #{relation_conv_block.2} parent=11 // pred_fallthru
        _
    $region12: #{relation_conv_block.2} parent=5 // pred_fallthru
      _
    %p127 = scmp.lt.s32.totalorder %s10, 2
    // Predicated region
    $region17: #{relation_conv_block.2} parent=5 // pred_check
      %p128 = pneg %p127
    $region18: #{relation_conv_block.2} parent=5 // pred_check_branch
      %130 = sbr.rel (%p128) target = $region20
    $region19: #{relation_conv_block.2} parent=5 // pred_region
      // Predicated region
      $region21: #{relation_conv_block.2} parent=19 // pred_check
        %p131 = pneg %p30
      $region22: #{relation_conv_block.2} parent=19 // pred_check_branch
        %133 = sbr.rel (%p131) target = $region24
      $region23: #{relation_conv_block.2} parent=19 // pred_region
        %s134 = smul.u32 32, %s10
        %p135 = scmp.lt.s32.totalorder %s134, 63
        %s136 = scalar_select %p135, %s134, 63
        %s137 = smul.addr %s136, 4
        %s138 = scalar_lea.vmem %s0, %s137
        %s139 = smul.u32 32, %s10
      $region24: #{relation_conv_block.2} parent=19 // pred_fallthru
        _
    $region20: #{relation_conv_block.2} parent=5 // pred_fallthru
      _
    %p140 = scmp.le.s32.totalorder 1, %s10
    %p141 = scmp.lt.s32.totalorder %s10, 3
    %p142 = pnand %p140, %p141
    %p143 = pneg %p142
    // Predicated region
    $region25: #{relation_conv_block.2} parent=5 // pred_check
      _
    $region26: #{relation_conv_block.2} parent=5 // pred_check_branch
      %145 = sbr.rel (%p142) target = $region28
    $region27: #{relation_conv_block.2} parent=5 // pred_region
      %s146 = ssub.s32 %s10, 1
      %s147 = smul.u32 32, %s15
      %p148 = scmp.lt.s32.totalorder %s147, 63
      %s149 = scalar_select %p148, %s147, 63
      %s150 = smul.addr %s149, 4
      %s151 = scalar_lea.vmem %s0, %s150
      %p152 = pneg %p36
      %p153 = pneg %p33
      %p154 = pneg %p57
      %p155 = pneg %p54
      %p156 = pneg %p83
      %p157 = pneg %p80
      %p158 = scmp.lt.s32.totalorder %s15, 1
      %s159 = scalar_select %p158, %s15, 1
      %s160 = scalar_lea.vmem %s2, %s159
      %p161 = pneg %p109
      %p162 = pneg %p106
      %p163 = scmp.lt.s32.totalorder %s15, 1
      %s164 = scalar_select %p163, %s15, 1
      %s165 = scalar_lea.vmem %s3, %s164
      %s166 = smul.u32 32, %s15
      %p167 = scmp.lt.s32.totalorder %s166, 63
      %s168 = scalar_select %p167, %s166, 63
      %s169 = smul.addr %s168, 4
      %s170 = scalar_lea.vmem %s0, %s169
      %s171 = smul.u32 32, %s15
      %p172 = scmp.lt.s32.totalorder %s15, 1
      %s173 = scalar_select %p172, %s15, 1
      %s174 = scalar_lea.vmem %s2, %s173
      %p175 = scmp.lt.s32.totalorder %s15, 1
      %s176 = scalar_select %p175, %s15, 1
      %s177 = scalar_lea.vmem %s3, %s176
      %v179 = vld [vmem:[%s170] sm:$0xf]
      %v180 = vld [vmem:[%s170 + $0x4] sm:$0xf]
      %v181 = vld [vmem:[%s170 + $0x8] sm:$0xf]
      %v182 = vld [vmem:[%s170 + $0xc] sm:$0xf]
      %v183 = vld [vmem:[%s170 + $0x10] sm:$0xf]
      %v184 = vld [vmem:[%s170 + $0x14] sm:$0xf]
      %v185 = vld [vmem:[%s170 + $0x18] sm:$0xf]
      %v186 = vld [vmem:[%s170 + $0x1c] sm:$0xf]
      %v187 = vld [vmem:[%s170 + $0x20] sm:$0xf]
      %v188 = vld [vmem:[%s170 + $0x24] sm:$0xf]
      %v189 = vld [vmem:[%s170 + $0x28] sm:$0xf]
      %v190 = vld [vmem:[%s170 + $0x2c] sm:$0xf]
      %v191 = vld [vmem:[%s170 + $0x30] sm:$0xf]
      %v192 = vld [vmem:[%s170 + $0x34] sm:$0xf]
      %v193 = vld [vmem:[%s170 + $0x38] sm:$0xf]
      %v194 = vld [vmem:[%s170 + $0x3c] sm:$0xf]
      %v195 = vld [vmem:[%s170 + $0x40] sm:$0xf]
      %v196 = vld [vmem:[%s170 + $0x44] sm:$0xf]
      %v197 = vld [vmem:[%s170 + $0x48] sm:$0xf]
      %v198 = vld [vmem:[%s170 + $0x4c] sm:$0xf]
      %v199 = vld [vmem:[%s170 + $0x50] sm:$0xf]
      %v200 = vld [vmem:[%s170 + $0x54] sm:$0xf]
      %v201 = vld [vmem:[%s170 + $0x58] sm:$0xf]
      %v202 = vld [vmem:[%s170 + $0x5c] sm:$0xf]
      %v203 = vld [vmem:[%s170 + $0x60] sm:$0xf]
      %v204 = vld [vmem:[%s170 + $0x64] sm:$0xf]
      %v205 = vld [vmem:[%s170 + $0x68] sm:$0xf]
      %v206 = vld [vmem:[%s170 + $0x6c] sm:$0xf]
      %v207 = vld [vmem:[%s170 + $0x70] sm:$0xf]
      %v208 = vld [vmem:[%s170 + $0x74] sm:$0xf]
      %v209 = vld [vmem:[%s170 + $0x78] sm:$0xf]
      %v210 = vld [vmem:[%s170 + $0x7c] sm:$0xf]
      %v211 = vld [vmem:[%s1] sm:$0xf]
      %v212 = vld [vmem:[%s1 + $0x4] sm:$0xf]
      %v213 = vld [vmem:[%s1 + $0x8] sm:$0xf]
      %v214 = vld [vmem:[%s1 + $0xc] sm:$0xf]
      %v215 = vld [vmem:[%s1 + $0x10] sm:$0x3]
      %v248 = vunpack.c.l.b16 %v179
      %v249 = vunpack.c.l.b16 %v180
      %v250 = vunpack.c.l.b16 %v181
      %v251 = vunpack.c.l.b16 %v182
      %v252 = vunpack.c.l.b16 %v183
      %v253 = vunpack.c.l.b16 %v184
      %v254 = vunpack.c.l.b16 %v185
      %v255 = vunpack.c.l.b16 %v186
      %v256 = vunpack.c.l.b16 %v187
      %v257 = vunpack.c.l.b16 %v188
      %v258 = vunpack.c.l.b16 %v189
      %v259 = vunpack.c.l.b16 %v190
      %v260 = vunpack.c.l.b16 %v191
      %v261 = vunpack.c.l.b16 %v192
      %v262 = vunpack.c.l.b16 %v193
      %v263 = vunpack.c.l.b16 %v194
      %v264 = vunpack.c.l.b16 %v195
      %v265 = vunpack.c.l.b16 %v196
      %v266 = vunpack.c.l.b16 %v197
      %v267 = vunpack.c.l.b16 %v198
      %v268 = vunpack.c.l.b16 %v199
      %v269 = vunpack.c.l.b16 %v200
      %v270 = vunpack.c.l.b16 %v201
      %v271 = vunpack.c.l.b16 %v202
      %v272 = vunpack.c.l.b16 %v203
      %v273 = vunpack.c.l.b16 %v204
      %v274 = vunpack.c.l.b16 %v205
      %v275 = vunpack.c.l.b16 %v206
      %v276 = vunpack.c.l.b16 %v207
      %v277 = vunpack.c.l.b16 %v208
      %v278 = vunpack.c.l.b16 %v209
      %v279 = vunpack.c.l.b16 %v210
      %v280 = vpack.c.b16 %v249, %v248
      %v281 = vpack.c.b16 %v251, %v250
      %v282 = vpack.c.b16 %v253, %v252
      %v283 = vpack.c.b16 %v255, %v254
      %v284 = vpack.c.b16 %v257, %v256
      %v285 = vpack.c.b16 %v259, %v258
      %v286 = vpack.c.b16 %v261, %v260
      %v287 = vpack.c.b16 %v263, %v262
      %v288 = vpack.c.b16 %v265, %v264
      %v289 = vpack.c.b16 %v267, %v266
      %v290 = vpack.c.b16 %v269, %v268
      %v291 = vpack.c.b16 %v271, %v270
      %v292 = vpack.c.b16 %v273, %v272
      %v293 = vpack.c.b16 %v275, %v274
      %v294 = vpack.c.b16 %v277, %v276
      %v295 = vpack.c.b16 %v279, %v278
      %v301 = vunpack.c.l.b16 %v211
      %v302 = vunpack.c.l.b16 %v212
      %v303 = vunpack.c.l.b16 %v213
      %v304 = vunpack.c.l.b16 %v214
      %v305 = vunpack.c.l.b16 %v215
      %v306 = vpack.c.b16 %v302, %v301
      %v307 = vpack.c.b16 %v304, %v303
      %v308 = vpack.c.b16 %v305, %v305
      %vm311 = vcmask 293888
      %v313 = vsel %vm311, %v280, 0
      %v316 = vsel %vm311, %v281, 0
      %v319 = vsel %vm311, %v282, 0
      %v322 = vsel %vm311, %v283, 0
      %v325 = vsel %vm311, %v284, 0
      %v328 = vsel %vm311, %v285, 0
      %v331 = vsel %vm311, %v286, 0
      %v334 = vsel %vm311, %v287, 0
      %v337 = vsel %vm311, %v288, 0
      %v340 = vsel %vm311, %v289, 0
      %v343 = vsel %vm311, %v290, 0
      %v346 = vsel %vm311, %v291, 0
      %v349 = vsel %vm311, %v292, 0
      %v352 = vsel %vm311, %v293, 0
      %v355 = vsel %vm311, %v294, 0
      %v358 = vsel %vm311, %v295, 0
      %vm360 = vcmask 1041408
      %v362 = vsel %vm360, %v308, 0
      %364 = vmatprep.subr.bf16.mxu0 0
      %365 = vmatpush1.bf16.msra.mxu0 0
      %366 = vmatprep.subr.bf16.mxu0 0
      %367 = vmatpush1.bf16.msra.mxu0 0
      %368 = vmatprep.subr.bf16.mxu0 0
      %369 = vmatpush1.bf16.msra.mxu0 0
      %370 = vmatprep.subr.bf16.mxu0 0
      %371 = vmatpush1.bf16.msra.mxu0 0
      %372 = vmatprep.subr.bf16.mxu0 0
      %373 = vmatpush1.bf16.msra.mxu0 0
      %374 = vmatprep.subr.bf16.mxu0 0
      %375 = vmatpush1.bf16.msra.mxu0 %v362
      %376 = vmatprep.subr.bf16.mxu0 0
      %377 = vmatpush1.bf16.msra.mxu0 %v307
      %378 = vmatprep.subr.bf16.mxu0 0
      %379 = vmatpush1.bf16.msra.mxu0 %v306
      %380 = vmatprep.subr.bf16.mxu0 0
      %381 = vmatpush2.bf16.msra.mxu0 0
      %382 = vmatprep.subr.bf16.mxu0 0
      %383 = vmatpush2.bf16.msra.mxu0 0
      %384 = vmatprep.subr.bf16.mxu0 0
      %385 = vmatpush2.bf16.msra.mxu0 0
      %386 = vmatprep.subr.bf16.mxu0 0
      %387 = vmatpush2.bf16.msra.mxu0 0
      %388 = vmatprep.subr.bf16.mxu0 0
      %389 = vmatpush2.bf16.msra.mxu0 0
      %390 = vmatprep.subr.bf16.mxu0 0
      %391 = vmatpush2.bf16.msra.mxu0 0
      %392 = vmatprep.subr.bf16.mxu0 0
      %393 = vmatpush2.bf16.msra.mxu0 0
      %394 = vmatprep.subr.bf16.mxu0 0
      %395 = vmatpush2.bf16.msra.mxu0 0
      %396 = vmatprep.mubr.bf16.mxu0 0
      %397 = vmatmul.mubr.bf16.gmra.mxu0 %v313
      %v398 = vpop.f32.mrf.mxu0
      %v399 = vadd.f32 0.0, %v398
      %v400 = vpop.f32.mrf.mxu0
      %v401 = vpop.f32.mrf.mxu0
      %v402 = vadd.f32 0.0, %v401
      %v403 = vpop.f32.mrf.mxu0
      %404 = vmatprep.mubr.bf16.mxu0 0
      %405 = vmatmul.mubr.bf16.gmra.mxu0 %v316
      %v406 = vpop.f32.mrf.mxu0
      %v407 = vadd.f32 0.0, %v406
      %v408 = vpop.f32.mrf.mxu0
      %v409 = vpop.f32.mrf.mxu0
      %v410 = vadd.f32 0.0, %v409
      %v411 = vpop.f32.mrf.mxu0
      %412 = vmatprep.mubr.bf16.mxu0 0
      %413 = vmatmul.mubr.bf16.gmra.mxu0 %v319
      %v414 = vpop.f32.mrf.mxu0
      %v415 = vadd.f32 0.0, %v414
      %v416 = vpop.f32.mrf.mxu0
      %v417 = vpop.f32.mrf.mxu0
      %v418 = vadd.f32 0.0, %v417
      %v419 = vpop.f32.mrf.mxu0
      %420 = vmatprep.mubr.bf16.mxu0 0
      %421 = vmatmul.mubr.bf16.gmra.mxu0 %v322
      %v422 = vpop.f32.mrf.mxu0
      %v423 = vadd.f32 0.0, %v422
      %v424 = vpop.f32.mrf.mxu0
      %v425 = vpop.f32.mrf.mxu0
      %v426 = vadd.f32 0.0, %v425
      %v427 = vpop.f32.mrf.mxu0
      %428 = vmatprep.mubr.bf16.mxu0 0
      %429 = vmatmul.mubr.bf16.gmra.mxu0 %v325
      %v430 = vpop.f32.mrf.mxu0
      %v431 = vadd.f32 0.0, %v430
      %v432 = vpop.f32.mrf.mxu0
      %v433 = vpop.f32.mrf.mxu0
      %v434 = vadd.f32 0.0, %v433
      %v435 = vpop.f32.mrf.mxu0
      %436 = vmatprep.mubr.bf16.mxu0 0
      %437 = vmatmul.mubr.bf16.gmra.mxu0 %v328
      %v438 = vpop.f32.mrf.mxu0
      %v439 = vadd.f32 0.0, %v438
      %v440 = vpop.f32.mrf.mxu0
      %v441 = vpop.f32.mrf.mxu0
      %v442 = vadd.f32 0.0, %v441
      %v443 = vpop.f32.mrf.mxu0
      %444 = vmatprep.mubr.bf16.mxu0 0
      %445 = vmatmul.mubr.bf16.gmra.mxu0 %v331
      %v446 = vpop.f32.mrf.mxu0
      %v447 = vadd.f32 0.0, %v446
      %v448 = vpop.f32.mrf.mxu0
      %v449 = vpop.f32.mrf.mxu0
      %v450 = vadd.f32 0.0, %v449
      %v451 = vpop.f32.mrf.mxu0
      %452 = vmatprep.mubr.bf16.mxu0 0
      %453 = vmatmul.mubr.bf16.gmra.mxu0 %v334
      %v454 = vpop.f32.mrf.mxu0
      %v455 = vadd.f32 0.0, %v454
      %v456 = vpop.f32.mrf.mxu0
      %v457 = vpop.f32.mrf.mxu0
      %v458 = vadd.f32 0.0, %v457
      %v459 = vpop.f32.mrf.mxu0
      %460 = vmatprep.mubr.bf16.mxu0 0
      %461 = vmatmul.mubr.bf16.gmra.mxu0 %v337
      %v462 = vpop.f32.mrf.mxu0
      %v463 = vadd.f32 0.0, %v462
      %v464 = vpop.f32.mrf.mxu0
      %v465 = vpop.f32.mrf.mxu0
      %v466 = vadd.f32 0.0, %v465
      %v467 = vpop.f32.mrf.mxu0
      %468 = vmatprep.mubr.bf16.mxu0 0
      %469 = vmatmul.mubr.bf16.gmra.mxu0 %v340
      %v470 = vpop.f32.mrf.mxu0
      %v471 = vadd.f32 0.0, %v470
      %v472 = vpop.f32.mrf.mxu0
      %v473 = vpop.f32.mrf.mxu0
      %v474 = vadd.f32 0.0, %v473
      %v475 = vpop.f32.mrf.mxu0
      %476 = vmatprep.mubr.bf16.mxu0 0
      %477 = vmatmul.mubr.bf16.gmra.mxu0 %v343
      %v478 = vpop.f32.mrf.mxu0
      %v479 = vadd.f32 0.0, %v478
      %v480 = vpop.f32.mrf.mxu0
      %v481 = vpop.f32.mrf.mxu0
      %v482 = vadd.f32 0.0, %v481
      %v483 = vpop.f32.mrf.mxu0
      %484 = vmatprep.mubr.bf16.mxu0 0
      %485 = vmatmul.mubr.bf16.gmra.mxu0 %v346
      %v486 = vpop.f32.mrf.mxu0
      %v487 = vadd.f32 0.0, %v486
      %v488 = vpop.f32.mrf.mxu0
      %v489 = vpop.f32.mrf.mxu0
      %v490 = vadd.f32 0.0, %v489
      %v491 = vpop.f32.mrf.mxu0
      %492 = vmatprep.mubr.bf16.mxu0 0
      %493 = vmatmul.mubr.bf16.gmra.mxu0 %v349
      %v494 = vpop.f32.mrf.mxu0
      %v495 = vadd.f32 0.0, %v494
      %v496 = vpop.f32.mrf.mxu0
      %v497 = vpop.f32.mrf.mxu0
      %v498 = vadd.f32 0.0, %v497
      %v499 = vpop.f32.mrf.mxu0
      %500 = vmatprep.mubr.bf16.mxu0 0
      %501 = vmatmul.mubr.bf16.gmra.mxu0 %v352
      %v502 = vpop.f32.mrf.mxu0
      %v503 = vadd.f32 0.0, %v502
      %v504 = vpop.f32.mrf.mxu0
      %v505 = vpop.f32.mrf.mxu0
      %v506 = vadd.f32 0.0, %v505
      %v507 = vpop.f32.mrf.mxu0
      %508 = vmatprep.mubr.bf16.mxu0 0
      %509 = vmatmul.mubr.bf16.gmra.mxu0 %v355
      %v510 = vpop.f32.mrf.mxu0
      %v511 = vadd.f32 0.0, %v510
      %v512 = vpop.f32.mrf.mxu0
      %v513 = vpop.f32.mrf.mxu0
      %v514 = vadd.f32 0.0, %v513
      %v515 = vpop.f32.mrf.mxu0
      %516 = vmatprep.mubr.bf16.mxu0 0
      %517 = vmatmul.mubr.bf16.gmra.mxu0 %v358
      %v518 = vpop.f32.mrf.mxu0
      %v519 = vadd.f32 0.0, %v518
      %v520 = vpop.f32.mrf.mxu0
      %v521 = vpop.f32.mrf.mxu0
      %v522 = vadd.f32 0.0, %v521
      %v523 = vpop.f32.mrf.mxu0
      %524 = vdwg.mxu0
      %v525 = vadd.f32 %v399, %v402
      %v526 = vadd.f32 %v525, %v407
      %v527 = vadd.f32 %v526, %v410
      %v528 = vadd.f32 %v527, %v415
      %v529 = vadd.f32 %v528, %v418
      %v530 = vadd.f32 %v529, %v423
      %v531 = vadd.f32 %v530, %v426
      %v532 = vadd.f32 %v531, %v431
      %v533 = vadd.f32 %v532, %v434
      %v534 = vadd.f32 %v533, %v439
      %v535 = vadd.f32 %v534, %v442
      %v536 = vadd.f32 %v535, %v447
      %v537 = vadd.f32 %v536, %v450
      %v538 = vadd.f32 %v537, %v455
      %v539 = vadd.f32 %v538, %v458
      %v540 = vadd.f32 %v539, %v463
      %v541 = vadd.f32 %v540, %v466
      %v542 = vadd.f32 %v541, %v471
      %v543 = vadd.f32 %v542, %v474
      %v544 = vadd.f32 %v543, %v479
      %v545 = vadd.f32 %v544, %v482
      %v546 = vadd.f32 %v545, %v487
      %v547 = vadd.f32 %v546, %v490
      %v548 = vadd.f32 %v547, %v495
      %v549 = vadd.f32 %v548, %v498
      %v550 = vadd.f32 %v549, %v503
      %v551 = vadd.f32 %v550, %v506
      %v552 = vadd.f32 %v551, %v511
      %v553 = vadd.f32 %v552, %v514
      %v554 = vadd.f32 %v553, %v519
      %v555 = vadd.f32 %v554, %v522
      %v556 = vrot.slane %v555, 4
      %v557 = vadd.f32 %v555, %v556
      %v558 = vrot.slane %v557, 2
      %v559 = vadd.f32 %v557, %v558
      %v560 = vrot.slane %v559, 1
      %v561 = vadd.f32 %v559, %v560
      %562 = vst [vmem:[%s174] sm:$0x1] %v561
      %v563 = vmul.f32 %v399, %v399
      %v564 = vmul.f32 %v402, %v402
      %v565 = vmul.f32 %v407, %v407
      %v566 = vmul.f32 %v410, %v410
      %v567 = vmul.f32 %v415, %v415
      %v568 = vmul.f32 %v418, %v418
      %v569 = vmul.f32 %v423, %v423
      %v570 = vmul.f32 %v426, %v426
      %v571 = vmul.f32 %v431, %v431
      %v572 = vmul.f32 %v434, %v434
      %v573 = vmul.f32 %v439, %v439
      %v574 = vmul.f32 %v442, %v442
      %v575 = vmul.f32 %v447, %v447
      %v576 = vmul.f32 %v450, %v450
      %v577 = vmul.f32 %v455, %v455
      %v578 = vmul.f32 %v458, %v458
      %v579 = vmul.f32 %v463, %v463
      %v580 = vmul.f32 %v466, %v466
      %v581 = vmul.f32 %v471, %v471
      %v582 = vmul.f32 %v474, %v474
      %v583 = vmul.f32 %v479, %v479
      %v584 = vmul.f32 %v482, %v482
      %v585 = vmul.f32 %v487, %v487
      %v586 = vmul.f32 %v490, %v490
      %v587 = vmul.f32 %v495, %v495
      %v588 = vmul.f32 %v498, %v498
      %v589 = vmul.f32 %v503, %v503
      %v590 = vmul.f32 %v506, %v506
      %v591 = vmul.f32 %v511, %v511
      %v592 = vmul.f32 %v514, %v514
      %v593 = vmul.f32 %v519, %v519
      %v594 = vmul.f32 %v522, %v522
      %v595 = vadd.f32 %v563, %v564
      %v596 = vadd.f32 %v595, %v565
      %v597 = vadd.f32 %v596, %v566
      %v598 = vadd.f32 %v597, %v567
      %v599 = vadd.f32 %v598, %v568
      %v600 = vadd.f32 %v599, %v569
      %v601 = vadd.f32 %v600, %v570
      %v602 = vadd.f32 %v601, %v571
      %v603 = vadd.f32 %v602, %v572
      %v604 = vadd.f32 %v603, %v573
      %v605 = vadd.f32 %v604, %v574
      %v606 = vadd.f32 %v605, %v575
      %v607 = vadd.f32 %v606, %v576
      %v608 = vadd.f32 %v607, %v577
      %v609 = vadd.f32 %v608, %v578
      %v610 = vadd.f32 %v609, %v579
      %v611 = vadd.f32 %v610, %v580
      %v612 = vadd.f32 %v611, %v581
      %v613 = vadd.f32 %v612, %v582
      %v614 = vadd.f32 %v613, %v583
      %v615 = vadd.f32 %v614, %v584
      %v616 = vadd.f32 %v615, %v585
      %v617 = vadd.f32 %v616, %v586
      %v618 = vadd.f32 %v617, %v587
      %v619 = vadd.f32 %v618, %v588
      %v620 = vadd.f32 %v619, %v589
      %v621 = vadd.f32 %v620, %v590
      %v622 = vadd.f32 %v621, %v591
      %v623 = vadd.f32 %v622, %v592
      %v624 = vadd.f32 %v623, %v593
      %v625 = vadd.f32 %v624, %v594
      %v626 = vrot.slane %v625, 4
      %v627 = vadd.f32 %v625, %v626
      %v628 = vrot.slane %v627, 2
      %v629 = vadd.f32 %v627, %v628
      %v630 = vrot.slane %v629, 1
      %v631 = vadd.f32 %v629, %v630
      %632 = vst [vmem:[%s177] sm:$0x1] %v631
      %p633 = scmp.lt.s32.totalorder %s15, 1
      %s634 = scalar_select %p633, %s15, 1
      %s635 = scalar_lea.vmem %s2, %s634
      %p636 = scmp.lt.s32.totalorder %s15, 1
      %s637 = scalar_select %p636, %s15, 1
      %s638 = scalar_lea.vmem %s3, %s637
      // Predicated region
      $region29: #{relation_conv_block.2} parent=27 // pred_check
        %p639 = pneg %p80
      $region30: #{relation_conv_block.2} parent=27 // pred_check_branch
        %641 = sbr.rel (%p639) target = $region32
      $region31: #{relation_conv_block.2} parent=27 // pred_region
        _
      $region32: #{relation_conv_block.2} parent=27 // pred_fallthru
        _
      // Predicated region
      $region33: #{relation_conv_block.2} parent=27 // pred_check
        %p642 = pneg %p106
      $region34: #{relation_conv_block.2} parent=27 // pred_check_branch
        %644 = sbr.rel (%p642) target = $region36
      $region35: #{relation_conv_block.2} parent=27 // pred_region
        _
      $region36: #{relation_conv_block.2} parent=27 // pred_fallthru
        _
    $region28: #{relation_conv_block.2} parent=5 // pred_fallthru
      _
    %p645 = scmp.le.s32.totalorder 2, %s10
    // Predicated region
    $region37: #{relation_conv_block.2} parent=5 // pred_check
      %p646 = pneg %p645
    $region38: #{relation_conv_block.2} parent=5 // pred_check_branch
      %648 = sbr.rel (%p646) target = $region40
    $region39: #{relation_conv_block.2} parent=5 // pred_region
      %s649 = ssub.s32 %s10, 2
      // Predicated region
      $region41: #{relation_conv_block.2} parent=39 // pred_check
        %p650 = pneg %p86
      $region42: #{relation_conv_block.2} parent=39 // pred_check_branch
        %652 = sbr.rel (%p650) target = $region44
      $region43: #{relation_conv_block.2} parent=39 // pred_region
        %p653 = scmp.lt.s32.totalorder %s16, 1
        %s654 = scalar_select %p653, %s16, 1
        %s655 = scalar_lea.vmem %s2, %s654
      $region44: #{relation_conv_block.2} parent=39 // pred_fallthru
        _
      // Predicated region
      $region45: #{relation_conv_block.2} parent=39 // pred_check
        %p656 = pneg %p112
      $region46: #{relation_conv_block.2} parent=39 // pred_check_branch
        %658 = sbr.rel (%p656) target = $region48
      $region47: #{relation_conv_block.2} parent=39 // pred_region
        %p659 = scmp.lt.s32.totalorder %s16, 1
        %s660 = scalar_select %p659, %s16, 1
        %s661 = scalar_lea.vmem %s3, %s660
      $region48: #{relation_conv_block.2} parent=39 // pred_fallthru
        _
    $region40: #{relation_conv_block.2} parent=5 // pred_fallthru
      _
  $region6: #{relation_conv_block.2} parent=0 // loop_footer
    %s14 = sadd.s32 1, %s10
  $region7: #{relation_conv_block.2} parent=0 // loop_footer_branch
    %9 = sbr.rel target = $region3
  $region8: #{relation_conv_block.2} parent=0 // loop_exit
    _

</llo_original>
